<compile_context>
chip_gen: v5e
topology: v5e:2x2
jax: 0.10.0
libtpu: 0.0.40
codegen_flags: <defaults>
</compile_context>

<pallas_src>
import math
from functools import partial

import jax
import jax.numpy as jnp
from jax import lax
from jax.experimental import pallas as pl
from jax.experimental.pallas import tpu as pltpu

_INV_SQRT2 = 1.0 / math.sqrt(2.0)


def _gelu_exact(x):
    # PyTorch nn.GELU() default (exact, erf-based).
    return 0.5 * x * (1.0 + lax.erf(x * _INV_SQRT2))


def downsample_kernel(p_ref, w_ref, gbb_ref, o_ref, *, eps):
    # p_ref  : (1, Cin*9, TN)   im2col patches, one batch elem / one spatial tile
    # w_ref  : (Cout, Cin*9)    conv weights as a matrix
    # gbb_ref: (Cout, 3)        [conv_bias | ln_gamma | ln_beta] columns
    # o_ref  : (1, Cout, TN)    channels on sublanes, spatial on lanes
    p = p_ref[0]                                                       # (Kd, TN)

    # Conv2d(k=3, s=2, p=1) == one MXU matmul over the patch matrix (fp32 acc),
    # bias broadcast along lanes.
    conv = jnp.dot(w_ref[...], p, preferred_element_type=jnp.float32)  # (Cout, TN)
    conv = conv + gbb_ref[:, 0:1]

    # LayerNorm over the channel (sublane) axis, per spatial column.
    inv_c = 1.0 / conv.shape[0]
    mu = jnp.sum(conv, axis=0, keepdims=True) * inv_c
    xc = conv - mu
    var = jnp.sum(xc * xc, axis=0, keepdims=True) * inv_c
    xn = xc * lax.rsqrt(var + eps)
    xn = xn * gbb_ref[:, 1:2] + gbb_ref[:, 2:3]

    o_ref[0, :, :] = _gelu_exact(xn).astype(o_ref.dtype)


def _pick_spatial_tile(npix, cap=1024):
    """Largest lane-dense (multiple of 128) tile <= cap that divides npix,
    or the full extent if npix is small / has no such divisor."""
    if npix <= cap:
        return npix
    best = None
    t = 128
    while t <= cap:
        if npix % t == 0:
            best = t
        t += 128
    return best if best is not None else npix


def downsample_layer(x, conv_w, conv_b, gamma, beta, *, eps=1e-5):
    """x: (B, Cin, H, W) NCHW -> (B, Cout, Ho, Wo) NCHW (Ho = ceil(H/2), Wo = ceil(W/2))."""
    B, Cin, H, W = x.shape
    Cout = conv_w.shape[0]
    K = 3
    Ho = (H + 2 - K) // 2 + 1
    Wo = (W + 2 - K) // 2 + 1
    Npix = Ho * Wo
    Kd = Cin * K * K

    # ---- wrapper-side im2col (layout plumbing, done once in HBM by XLA) ----
    xp = jnp.pad(x, ((0, 0), (0, 0), (1, 1), (1, 1)))
    taps = [xp[:, :, kh:kh + 2 * Ho:2, kw:kw + 2 * Wo:2]               # (B, Cin, Ho, Wo)
            for kh in range(K) for kw in range(K)]
    patches = jnp.stack(taps, axis=2).reshape(B, Kd, Npix)             # (B, Cin*9, Npix)

    w_mat = conv_w.reshape(Cout, Kd)                                   # (Cout, Cin*9)
    gbb = jnp.stack([conv_b, gamma, beta], axis=1)                     # (Cout, 3)

    TN = _pick_spatial_tile(Npix)
    grid = (B, Npix // TN)

    out = pl.pallas_call(
        partial(downsample_kernel, eps=eps),
        out_shape=jax.ShapeDtypeStruct((B, Cout, Npix), x.dtype),
        grid=grid,
        in_specs=[
            pl.BlockSpec((1, Kd, TN), lambda b, n: (b, 0, n)),
            pl.BlockSpec((Cout, Kd), lambda b, n: (0, 0)),
            pl.BlockSpec((Cout, 3), lambda b, n: (0, 0)),
        ],
        out_specs=pl.BlockSpec((1, Cout, TN), lambda b, n: (b, 0, n)),
        compiler_params=pltpu.CompilerParams(
            dimension_semantics=("parallel", "parallel")),
    )(patches, w_mat, gbb)

    return out.reshape(B, Cout, Ho, Wo)                                # free reshape -> NCHW


def reference(x, conv_w, conv_b, gamma, beta, *, eps=1e-5):
    """Pure-JAX reference mirroring the PyTorch forward."""
    conv = lax.conv_general_dilated(
        x, conv_w, window_strides=(2, 2), padding=((1, 1), (1, 1)),
        dimension_numbers=("NCHW", "OIHW", "NCHW")) + conv_b[None, :, None, None]
    y = jnp.transpose(conv, (0, 2, 3, 1))
    mu = y.mean(-1, keepdims=True)
    var = ((y - mu) ** 2).mean(-1, keepdims=True)
    yn = (y - mu) / jnp.sqrt(var + eps) * gamma + beta
    yn = jnp.transpose(yn, (0, 3, 1, 2))
    return _gelu_exact(yn)


if __name__ == "__main__":
    B, Cin, H, W = 2, 4, 16, 16
    Cout = 8

    key = jax.random.PRNGKey(0)
    k = jax.random.split(key, 5)
    conv_w = 0.2 * jax.random.normal(k[0], (Cout, Cin, 3, 3), jnp.float32)
    conv_b = 0.1 * jax.random.normal(k[1], (Cout,), jnp.float32)
    gamma = 1.0 + 0.1 * jax.random.normal(k[2], (Cout,), jnp.float32)
    beta = 0.1 * jax.random.normal(k[3], (Cout,), jnp.float32)
    x = jax.random.normal(k[4], (B, Cin, H, W), jnp.float32)

    out = downsample_layer(x, conv_w, conv_b, gamma, beta)
    out = jax.block_until_ready(out)

    ref = reference(x, conv_w, conv_b, gamma, beta)
    err = float(jnp.max(jnp.abs(out - ref)))
    assert jnp.allclose(out, ref, atol=1e-4, rtol=1e-4), f"max abs err {err}"
    print("KERNEL_OK")
</pallas_src>

<mosaic_0001>
module attributes {stable_mosaic.version = 11 : i64} {
  func.func @downsample_kernel(%arg0: i32, %arg1: i32, %arg2: memref<1x36x64xf32, #tpu.memory_space<vmem>>, %arg3: memref<8x36xf32, #tpu.memory_space<vmem>>, %arg4: memref<8x3xf32, #tpu.memory_space<vmem>>, %arg5: memref<1x8x64xf32, #tpu.memory_space<vmem>>) attributes {dimension_semantics = [#tpu.dimension_semantics<parallel>, #tpu.dimension_semantics<parallel>], iteration_bounds = array<i64: 2, 1>, scalar_prefetch = 0 : i64, scratch_operands = 0 : i64, tpu.core_type = #tpu.core_type<tc>, window_params = [{transform_indices = @transform_0, window_bounds = array<i64: 1, 36, 64>}, {pipeline_mode = #tpu.pipeline_mode<synchronous>, transform_indices = @transform_1, window_bounds = array<i64: 8, 36>}, {pipeline_mode = #tpu.pipeline_mode<synchronous>, transform_indices = @transform_2, window_bounds = array<i64: 8, 3>}, {transform_indices = @transform_3, window_bounds = array<i64: 1, 8, 64>}]} {
    %c0 = arith.constant 0 : index
    %c0_0 = arith.constant 0 : index
    %c0_1 = arith.constant 0 : index
    %0 = vector.load %arg2[%c0, %c0_0, %c0_1] : memref<1x36x64xf32, #tpu.memory_space<vmem>>, vector<1x36x64xf32>
    %1 = vector.shape_cast %0 : vector<1x36x64xf32> to vector<36x64xf32>
    %c0_2 = arith.constant 0 : index
    %c0_3 = arith.constant 0 : index
    %2 = vector.load %arg3[%c0_2, %c0_3] : memref<8x36xf32, #tpu.memory_space<vmem>>, vector<8x36xf32>
    %cst = arith.constant dense<0.000000e+00> : vector<8x64xf32>
    %3 = tpu.matmul %2, %1, %cst {dimension_numbers = #tpu.dot_dimension_numbers<[1], [0], [0], [1], [0, 0, 1, 1], [], []>} : vector<8x36xf32>, vector<36x64xf32>, vector<8x64xf32> -> vector<8x64xf32>
    %c0_4 = arith.constant 0 : index
    %c0_5 = arith.constant 0 : index
    %4 = vector.load %arg4[%c0_4, %c0_5] : memref<8x3xf32, #tpu.memory_space<vmem>>, vector<8x1xf32>
    %5 = vector.broadcast %4 : vector<8x1xf32> to vector<8x64xf32>
    %6 = arith.addf %3, %5 : vector<8x64xf32>
    %cst_6 = arith.constant dense<0.000000e+00> : vector<64xf32>
    %7 = vector.multi_reduction <add>, %6, %cst_6 [0] : vector<8x64xf32> to vector<64xf32>
    %8 = vector.shape_cast %7 : vector<64xf32> to vector<1x64xf32>
    %cst_7 = arith.constant 1.250000e-01 : f32
    %9 = vector.broadcast %cst_7 : f32 to vector<1x64xf32>
    %10 = arith.mulf %8, %9 : vector<1x64xf32>
    %11 = vector.broadcast %10 : vector<1x64xf32> to vector<8x64xf32>
    %12 = arith.subf %6, %11 : vector<8x64xf32>
    %13 = arith.mulf %12, %12 : vector<8x64xf32>
    %cst_8 = arith.constant dense<0.000000e+00> : vector<64xf32>
    %14 = vector.multi_reduction <add>, %13, %cst_8 [0] : vector<8x64xf32> to vector<64xf32>
    %15 = vector.shape_cast %14 : vector<64xf32> to vector<1x64xf32>
    %cst_9 = arith.constant 1.250000e-01 : f32
    %16 = vector.broadcast %cst_9 : f32 to vector<1x64xf32>
    %17 = arith.mulf %15, %16 : vector<1x64xf32>
    %cst_10 = arith.constant 9.99999974E-6 : f32
    %18 = vector.broadcast %cst_10 : f32 to vector<1x64xf32>
    %19 = arith.addf %17, %18 : vector<1x64xf32>
    %20 = math.rsqrt %19 : vector<1x64xf32>
    %21 = vector.broadcast %20 : vector<1x64xf32> to vector<8x64xf32>
    %22 = arith.mulf %12, %21 : vector<8x64xf32>
    %c0_11 = arith.constant 0 : index
    %c1 = arith.constant 1 : index
    %23 = vector.load %arg4[%c0_11, %c1] : memref<8x3xf32, #tpu.memory_space<vmem>>, vector<8x1xf32>
    %24 = vector.broadcast %23 : vector<8x1xf32> to vector<8x64xf32>
    %25 = arith.mulf %22, %24 : vector<8x64xf32>
    %c0_12 = arith.constant 0 : index
    %c2 = arith.constant 2 : index
    %26 = vector.load %arg4[%c0_12, %c2] : memref<8x3xf32, #tpu.memory_space<vmem>>, vector<8x1xf32>
    %27 = vector.broadcast %26 : vector<8x1xf32> to vector<8x64xf32>
    %28 = arith.addf %25, %27 : vector<8x64xf32>
    %cst_13 = arith.constant 5.000000e-01 : f32
    %29 = vector.broadcast %cst_13 : f32 to vector<8x64xf32>
    %30 = arith.mulf %29, %28 : vector<8x64xf32>
    %cst_14 = arith.constant 0.707106769 : f32
    %31 = vector.broadcast %cst_14 : f32 to vector<8x64xf32>
    %32 = arith.mulf %28, %31 : vector<8x64xf32>
    %33 = math.erf %32 : vector<8x64xf32>
    %cst_15 = arith.constant 1.000000e+00 : f32
    %34 = vector.broadcast %cst_15 : f32 to vector<8x64xf32>
    %35 = arith.addf %34, %33 : vector<8x64xf32>
    %36 = arith.mulf %30, %35 : vector<8x64xf32>
    %c0_16 = arith.constant 0 : index
    %c0_17 = arith.constant 0 : index
    %c0_18 = arith.constant 0 : index
    %37 = vector.load %arg5[%c0_16, %c0_17, %c0_18] : memref<1x8x64xf32, #tpu.memory_space<vmem>>, vector<1x8x64xf32>
    %38 = vector.shape_cast %37 : vector<1x8x64xf32> to vector<8x64xf32>
    %39 = vector.shape_cast %36 : vector<8x64xf32> to vector<1x8x64xf32>
    tpu.vector_store %arg5[%c0_16, %c0_17, %c0_18], %39 {strides = array<i32>} : memref<1x8x64xf32, #tpu.memory_space<vmem>>, vector<1x8x64xf32>,
    return
  }
  func.func @transform_0(%arg0: i32, %arg1: i32) -> (i32, i32, i32) {
    %c0_i32 = arith.constant 0 : i32
    %c0_i32_0 = arith.constant 0 : i32
    return %arg0, %c0_i32, %arg1 : i32, i32, i32
  }
  func.func @transform_1(%arg0: i32, %arg1: i32) -> (i32, i32) {
    %c0_i32 = arith.constant 0 : i32
    %c0_i32_0 = arith.constant 0 : i32
    %c0_i32_1 = arith.constant 0 : i32
    return %c0_i32, %c0_i32_0 : i32, i32
  }
  func.func @transform_2(%arg0: i32, %arg1: i32) -> (i32, i32) {
    %c0_i32 = arith.constant 0 : i32
    %c0_i32_0 = arith.constant 0 : i32
    %c0_i32_1 = arith.constant 0 : i32
    return %c0_i32, %c0_i32_0 : i32, i32
  }
  func.func @transform_3(%arg0: i32, %arg1: i32) -> (i32, i32, i32) {
    %c0_i32 = arith.constant 0 : i32
    %c0_i32_0 = arith.constant 0 : i32
    return %arg0, %c0_i32, %arg1 : i32, i32, i32
  }
}

</mosaic_0001>

<llo_original>
// kernel: tpu_custom_call.1
$region0: #{tpu_custom_call.1}
  #allocation0 [shape = 'u32[]', space=smem, size = 0x4, offset = 0x4, fixed_abs, tag = 'smem constant byte address 0x4 - core index']
  #allocation1 [shape = 'u32[72,128]{1,0:T(1,128)}', space=vmem, size = 0x9000, scoped, tag = 'internal scratch']
  %s0 = inlined_call_operand.vmem [shape: f32[2,36,64], index: 0, kind: input, shape index: {}]
  %s1 = inlined_call_operand.vmem [shape: f32[8,36], index: 1, kind: input, shape index: {}]
  %s2 = inlined_call_operand.vmem [shape: f32[8,3], index: 2, kind: input, shape index: {}]
  %s3 = inlined_call_operand.hbm [shape: f32[2,8,64], index: 3, kind: output, shape index: {}]
  %s4 = sld [smem:[#allocation0]]
  $region45: #{tpu_custom_call.1} parent=0
    _
  %s6 = ssub.s32 1, %s4
  %s7 = scalar_select 0, %s6, %s4
  $region1: #{tpu_custom_call.1} parent=0
    #allocation2 [shape = 'u8[8192]{0}', space=vmem, size = 0x2000, scoped, tag = 'output window, operand 0']
    #allocation3 [shape = 's32[2]{0}', space=sflag, size = 0x8, scoped, tag = 'scoped memory for tpu_custom_call.1']
    %8 = vsyncpa [#allocation3], 0
    %s9 = scalar_lea.sflag [#allocation3], 1
    %10 = vsyncpa %s9, 0
    loop: start=0, step=1, limit=4
    $region2: #{tpu_custom_call.1} parent=1 // loop_pre_header
      _
    $region3: #{tpu_custom_call.1} parent=1 // loop_header
      %s12 = sphi 0, %s16
      %p13 = scmp.ge.s32.totalorder %s12, 4
      %s19 = sphi 0, %s31
      %s20 = sphi 0, %s27
      %s21 = sphi 0, %s19
      %s22 = sphi 0, %s20
      %s23 = sphi 0, %s21
      %s24 = sphi 0, %s22
      %s36 = sphi 0, %s38
      %s39 = sphi 0, %s36
      %s40 = sphi 0, %s39
      %s56 = sphi 0, %s40
      %s60 = sphi 0, %s60
      %s62 = sphi 0, %s60
      %s63 = sphi 0, %s62
      %s77 = sphi 0, %s63
      %s81 = sphi 0, %s81
      %s83 = sphi 0, %s81
      %s84 = sphi 0, %s83
      %s98 = sphi 0, %s84
      %s106 = sphi 0, %s108
      %s109 = sphi 0, %s106
      %s110 = sphi 0, %s109
      %s126 = sphi 0, %s110
    $region4: #{tpu_custom_call.1} parent=1 // loop_header_branch
      %15 = sbr.rel (%p13) target = $region8
    $region5: #{tpu_custom_call.1} parent=1 // loop_body
      %s17 = ssub.s32 %s12, 1
      %s18 = ssub.s32 %s12, 2
      %s25 = sadd.s32 1, %s20
      %p26 = scmp.ge.s32.totalorder %s25, 1
      %s27 = scalar_select %p26, 0, %s25
      %s28 = sadd.s32 1, %s19
      %s29 = scalar_select %p26, %s28, %s19
      %p30 = scmp.ge.s32.totalorder %s29, 2
      %s31 = scalar_select %p30, 0, %s29
      %s32 = ssub.s32 %s19, %s31
      %s33 = ssub.s32 %s20, %s27
      %s34 = sor.u32 %s32, %s33
      %p35 = scmp.eq.s32.totalorder %s34, 0
      %s37 = sadd.s32 %s36, 1
      %s38 = scalar_select %p35, %s36, %s37
      %p41 = pneg %p35
      %p42 = scmp.eq.s32.totalorder %s12, 1
      %p43 = por %p41, %p42
      %p44 = scmp.ne.s32.totalorder %s36, %s39
      %p45 = scmp.eq.s32.totalorder %s12, 0
      %p46 = por %p44, %p45
      %p47 = scmp.ne.s32.totalorder %s36, %s39
      %p48 = scmp.eq.s32.totalorder %s17, 1
      %p49 = por %p47, %p48
      %p50 = scmp.ne.s32.totalorder %s39, %s40
      %p51 = scmp.eq.s32.totalorder %s17, 0
      %p52 = por %p50, %p51
      %p53 = scmp.ne.s32.totalorder %s39, %s40
      %p54 = scmp.eq.s32.totalorder %s18, 1
      %p55 = por %p53, %p54
      %p57 = scmp.ne.s32.totalorder %s40, %s56
      %p58 = scmp.eq.s32.totalorder %s18, 0
      %p59 = por %p57, %p58
      %s61 = sadd.s32 %s60, 1
      %p64 = scmp.eq.s32.totalorder %s12, 1
      %p65 = scmp.ne.s32.totalorder %s60, %s62
      %p66 = scmp.eq.s32.totalorder %s12, 0
      %p67 = por %p65, %p66
      %p68 = scmp.ne.s32.totalorder %s60, %s62
      %p69 = scmp.eq.s32.totalorder %s17, 1
      %p70 = por %p68, %p69
      %p71 = scmp.ne.s32.totalorder %s62, %s63
      %p72 = scmp.eq.s32.totalorder %s17, 0
      %p73 = por %p71, %p72
      %p74 = scmp.ne.s32.totalorder %s62, %s63
      %p75 = scmp.eq.s32.totalorder %s18, 1
      %p76 = por %p74, %p75
      %p78 = scmp.ne.s32.totalorder %s63, %s77
      %p79 = scmp.eq.s32.totalorder %s18, 0
      %p80 = por %p78, %p79
      %s82 = sadd.s32 %s81, 1
      %p85 = scmp.eq.s32.totalorder %s12, 1
      %p86 = scmp.ne.s32.totalorder %s81, %s83
      %p87 = scmp.eq.s32.totalorder %s12, 0
      %p88 = por %p86, %p87
      %p89 = scmp.ne.s32.totalorder %s81, %s83
      %p90 = scmp.eq.s32.totalorder %s17, 1
      %p91 = por %p89, %p90
      %p92 = scmp.ne.s32.totalorder %s83, %s84
      %p93 = scmp.eq.s32.totalorder %s17, 0
      %p94 = por %p92, %p93
      %p95 = scmp.ne.s32.totalorder %s83, %s84
      %p96 = scmp.eq.s32.totalorder %s18, 1
      %p97 = por %p95, %p96
      %p99 = scmp.ne.s32.totalorder %s84, %s98
      %p100 = scmp.eq.s32.totalorder %s18, 0
      %p101 = por %p99, %p100
      %s102 = ssub.s32 %s19, %s31
      %s103 = ssub.s32 %s20, %s27
      %s104 = sor.u32 %s102, %s103
      %p105 = scmp.eq.s32.totalorder %s104, 0
      %s107 = sadd.s32 %s106, 1
      %s108 = scalar_select %p105, %s106, %s107
      %p111 = pneg %p105
      %p112 = scmp.eq.s32.totalorder %s12, 1
      %p113 = por %p111, %p112
      %p114 = scmp.ne.s32.totalorder %s106, %s109
      %p115 = scmp.eq.s32.totalorder %s12, 0
      %p116 = por %p114, %p115
      %p117 = scmp.ne.s32.totalorder %s106, %s109
      %p118 = scmp.eq.s32.totalorder %s17, 1
      %p119 = por %p117, %p118
      %p120 = scmp.ne.s32.totalorder %s109, %s110
      %p121 = scmp.eq.s32.totalorder %s17, 0
      %p122 = por %p120, %p121
      %p123 = scmp.ne.s32.totalorder %s109, %s110
      %p124 = scmp.eq.s32.totalorder %s18, 1
      %p125 = por %p123, %p124
      %p127 = scmp.ne.s32.totalorder %s110, %s126
      %p128 = scmp.eq.s32.totalorder %s18, 0
      %p129 = por %p127, %p128
      %p130 = scmp.le.s32.totalorder 1, %s12
      %p131 = scmp.lt.s32.totalorder %s12, 3
      %p132 = pnand %p130, %p131
      %p133 = pneg %p132
      // Predicated region
      $region9: #{tpu_custom_call.1} parent=5 // pred_check
        _
      $region10: #{tpu_custom_call.1} parent=5 // pred_check_branch
        %135 = sbr.rel (%p132) target = $region12
      $region11: #{tpu_custom_call.1} parent=5 // pred_region
        %s136 = ssub.s32 %s12, 1
        // Predicated region
        $region13: #{tpu_custom_call.1} parent=11 // pred_check
          %p137 = pneg %p73
        $region14: #{tpu_custom_call.1} parent=11 // pred_check_branch
          %139 = sbr.rel (%p137) target = $region16
        $region15: #{tpu_custom_call.1} parent=11 // pred_region
          _
        $region16: #{tpu_custom_call.1} parent=11 // pred_fallthru
          _
        // Predicated region
        $region17: #{tpu_custom_call.1} parent=11 // pred_check
          %p140 = pneg %p94
        $region18: #{tpu_custom_call.1} parent=11 // pred_check_branch
          %142 = sbr.rel (%p140) target = $region20
        $region19: #{tpu_custom_call.1} parent=11 // pred_region
          _
        $region20: #{tpu_custom_call.1} parent=11 // pred_fallthru
          _
      $region12: #{tpu_custom_call.1} parent=5 // pred_fallthru
        _
      %p143 = scmp.lt.s32.totalorder %s12, 2
      // Predicated region
      $region21: #{tpu_custom_call.1} parent=5 // pred_check
        %p144 = pneg %p143
      $region22: #{tpu_custom_call.1} parent=5 // pred_check_branch
        %146 = sbr.rel (%p144) target = $region24
      $region23: #{tpu_custom_call.1} parent=5 // pred_region
        // Predicated region
        $region25: #{tpu_custom_call.1} parent=23 // pred_check
          %p147 = pneg %p46
        $region26: #{tpu_custom_call.1} parent=23 // pred_check_branch
          %149 = sbr.rel (%p147) target = $region28
        $region27: #{tpu_custom_call.1} parent=23 // pred_region
          %p150 = scmp.lt.s32.totalorder %s19, 1
          %s151 = scalar_select %p150, %s19, 1
          %p152 = scmp.lt.s32.totalorder %s20, 0
          %s153 = scalar_select %p152, %s20, 0
          %s154 = smul.addr %s151, 5
          %s155 = sadd.s32 %s153, %s154
          %s156 = smul.addr %s155, 8
          %s157 = scalar_lea.vmem %s0, %s156
        $region28: #{tpu_custom_call.1} parent=23 // pred_fallthru
          _
      $region24: #{tpu_custom_call.1} parent=5 // pred_fallthru
        _
      %p158 = scmp.le.s32.totalorder 1, %s12
      %p159 = scmp.lt.s32.totalorder %s12, 3
      %p160 = pnand %p158, %p159
      %p161 = pneg %p160
      // Predicated region
      $region29: #{tpu_custom_call.1} parent=5 // pred_check
        _
      $region30: #{tpu_custom_call.1} parent=5 // pred_check_branch
        %163 = sbr.rel (%p160) target = $region32
      $region31: #{tpu_custom_call.1} parent=5 // pred_region
        %s164 = ssub.s32 %s12, 1
        %p165 = scmp.lt.s32.totalorder %s21, 1
        %s166 = scalar_select %p165, %s21, 1
        %p167 = scmp.lt.s32.totalorder %s22, 0
        %s168 = scalar_select %p167, %s22, 0
        %s169 = smul.addr %s166, 5
        %s170 = sadd.s32 %s168, %s169
        %s171 = smul.addr %s170, 8
        %s172 = scalar_lea.vmem %s0, %s171
        %p173 = pneg %p52
        %p174 = pneg %p49
        %p175 = pneg %p73
        %p176 = pneg %p70
        %p177 = pneg %p94
        %p178 = pneg %p91
        %p179 = pneg %p122
        %p180 = pneg %p119
        %s181 = sand.u32 %s109, 1
        %s182 = scalar_lea.sflag [#allocation3], %s181
        %s183 = sand.u32 %s109, 1
        %s184 = smul.addr %s183, 8
        %s185 = scalar_lea.vmem [#allocation2], %s184
        %p186 = scmp.lt.s32.totalorder %s21, 1
        %s187 = scalar_select %p186, %s21, 1
        %p188 = scmp.lt.s32.totalorder %s22, 0
        %s189 = scalar_select %p188, %s22, 0
        %s190 = smul.addr %s187, 5
        %s191 = sadd.s32 %s189, %s190
        %s192 = smul.addr %s191, 8
        %s193 = scalar_lea.vmem %s0, %s192
        %v194 = vld [vmem:[%s193] sm:$0xff]
        %v195 = vld [vmem:[%s193 + $0x8] sm:$0xff]
        %v196 = vld [vmem:[%s193 + $0x10] sm:$0xff]
        %v197 = vld [vmem:[%s193 + $0x18] sm:$0xff]
        %v198 = vld [vmem:[%s193 + $0x20] sm:$0xf]
        %v199 = vld [vmem:[%s1] sm:$0xff]
        %v200 = vld [vmem:[%s2] sm:$0xff]
        %202 = vset.pattern.permute.xlu0 0
        %203 = vperm.xlu0 %202, %v200
        %v204 = vpop.permute.xlu0 %203
        %vm206 = vcmask 293888
        %v208 = vsel %vm206, %v199, 0
        %vm210 = vcmask 1043456
        %v212 = vsel %vm210, %v198, 0
        %214 = vmatpush.msra.mxu0 0.0
        %215 = vmatpush.msra.mxu0 0.0
        %216 = vmatpush.msra.mxu0 0.0
        %217 = vmatpush.msra.mxu0 0.0
        %218 = vmatpush.msra.mxu0 0.0
        %219 = vmatpush.msra.mxu0 0.0
        %220 = vmatpush.msra.mxu0 0.0
        %221 = vmatpush.msra.mxu0 0.0
        %222 = vmatpush.msra.mxu0 0.0
        %223 = vmatpush.msra.mxu0 0.0
        %224 = vmatpush.msra.mxu0 0.0
        %225 = vmatpush.msra.mxu0 %v212
        %226 = vmatpush.msra.mxu0 %v197
        %227 = vmatpush.msra.mxu0 %v196
        %228 = vmatpush.msra.mxu0 %v195
        %229 = vmatpush.msra.mxu0 %v194
        %230 = vmatmul.f32.gmra.mxu0 %v208
        %v231 = vpop.f32.mrf.mxu0
        %v232 = vadd.f32 %v204, %v231
        %233 = vdwg.mxu0
        %vm234 = vcmask 523264
        %v235 = vsel %vm234, %v232, 0.0
        %v236 = vrot.slane %v235, 4
        %v237 = vadd.f32 %v235, %v236
        %v238 = vrot.slane %v237, 2
        %v239 = vadd.f32 %v237, %v238
        %v240 = vrot.slane %v239, 1
        %v241 = vadd.f32 %v239, %v240
        %v242 = vmul.f32 %v241, 0.125
        %v243 = vsub.f32 %v232, %v242
        %v244 = vmul.f32 %v243, %v243
        %v245 = vsel %vm234, %v244, 0.0
        %v246 = vrot.slane %v245, 4
        %v247 = vadd.f32 %v245, %v246
        %v248 = vrot.slane %v247, 2
        %v249 = vadd.f32 %v247, %v248
        %v250 = vrot.slane %v249, 1
        %v251 = vadd.f32 %v249, %v250
        %v252 = vmul.f32 %v251, 0.125
        %v253 = vadd.f32 %v252, 1e-05
        %v254 = vrsqrt.pop %v253
        %v255 = vmul.f32 %v254, %v253
        %v256 = vmul.f32 %v255, %v254
        %v257 = vmul.f32 0.5, %v256
        %v258 = vsub.f32 1.5, %v257
        %v259 = vmul.f32 %v254, %v258
        %vm260 = vweird.f32 %v253
        %vm261 = vweird.f32 %v254
        %vm262 = vmor %vm260, %vm261
        %v263 = vsel %vm262, %v254, %v259
        %v264 = vmul.f32 %v243, %v263
        %265 = vset.pattern.permute.xlu0 1
        %266 = vperm.xlu0 %265, %v200
        %v267 = vpop.permute.xlu0 %266
        %v269 = vmul.f32 %v264, %v267
        %270 = vset.pattern.permute.xlu0 2
        %271 = vperm.xlu0 %270, %v200
        %v272 = vpop.permute.xlu0 %271
        %v274 = vadd.f32 %v269, %v272
        %v275 = vmul.f32 %v274, 0.5
        %v276 = vmul.f32 %v274, 0.70710677
        %v277 = vmul.f32 %v276, %v276
        %v278 = vmin.f32 16.0, %v277
        %v279 = vmul.f32 %v278, 2.1237322e-06
        %v280 = vadd.f32 %v279, 0.00028619796
        %v281 = vmul.f32 %v278, %v280
        %v282 = vadd.f32 %v281, 0.0036580483
        %v283 = vmul.f32 %v278, %v282
        %v284 = vadd.f32 %v283, 0.05243302
        %v285 = vmul.f32 %v278, %v284
        %v286 = vadd.f32 %v285, 0.18741608
        %v287 = vmul.f32 %v278, %v286
        %v288 = vadd.f32 %v287, 1.1283791
        %v289 = vmul.f32 %v276, %v288
        %v290 = vmul.f32 %v278, 3.8918573e-05
        %v291 = vadd.f32 %v290, 0.001143296
        %v292 = vmul.f32 %v278, %v291
        %v293 = vadd.f32 %v292, 0.014752088
        %v294 = vmul.f32 %v278, %v293
        %v295 = vadd.f32 %v294, 0.112945676
        %v296 = vmul.f32 %v278, %v295
        %v297 = vadd.f32 %v296, 0.4994258
        %v298 = vmul.f32 %v278, %v297
        %v299 = vadd.f32 %v298, 1.0
        %v300 = vrcp.pop %v299
        %v301 = vmul.f32 %v299, %v300
        %v302 = vsub.f32 1.0, %v301
        %v303 = vmul.f32 %v300, %v302
        %v304 = vadd.f32 %v300, %v303
        %vm305 = vweird.f32 %v299
        %vm306 = vweird.f32 %v300
        %vm307 = vmor %vm305, %vm306
        %v308 = vsel %vm307, %v300, %v304
        %v309 = vand.u32 2147483647, %v299
        %vm310 = vcmp.eq.f32.partialorder %v309, 8.507059e+37
        %v311 = vand.u32 %v299, 2147483648
        %v312 = vor.u32 1.1754944e-38, %v311
        %v313 = vsel %vm310, %v312, %v308
        %v314 = vmul.f32 %v289, %v313
        %v315 = vmin.f32 %v314, 1.0
        %v316 = vmax.f32 %v315, -1.0
        %v317 = vadd.f32 %v316, 1.0
        %v318 = vmul.f32 %v275, %v317
        %319 = vst.msk [vmem:[%s185] sm:$0xff] %vm234, %v318
        %s320 = sand.u32 %s109, 1
        %s321 = scalar_lea.sflag [#allocation3], %s320
        %s322 = sand.u32 %s109, 1
        %s323 = smul.addr %s322, 8
        %s324 = scalar_lea.vmem [#allocation2], %s323
        // Predicated region
        $region33: #{tpu_custom_call.1} parent=31 // pred_check
          %p325 = pneg %p119
        $region34: #{tpu_custom_call.1} parent=31 // pred_check_branch
          %327 = sbr.rel (%p325) target = $region36
        $region35: #{tpu_custom_call.1} parent=31 // pred_region
          %329 = vsyncadd %s321, 0
          %s330 = sadd.s32 %s22, %s21
          %s331 = smul.addr %s330, 8
          %s332 = scalar_lea.hbm %s3, %s331
          %s334 = sshll.u32 %s324, 4
          %s335 = int_to_ptr.vmem [resolvable:$true] %s334
          %s336 = sshll.u32 %s332, 4
          %s337 = int_to_ptr.hbm [resolvable:$true] %s336
          %339 = dma.vmem_to_hbm [thread:$0]  %s335, 128, %s337, %s321
        $region36: #{tpu_custom_call.1} parent=31 // pred_fallthru
          _
      $region32: #{tpu_custom_call.1} parent=5 // pred_fallthru
        _
      %p340 = scmp.le.s32.totalorder 2, %s12
      // Predicated region
      $region37: #{tpu_custom_call.1} parent=5 // pred_check
        %p341 = pneg %p340
      $region38: #{tpu_custom_call.1} parent=5 // pred_check_branch
        %343 = sbr.rel (%p341) target = $region40
      $region39: #{tpu_custom_call.1} parent=5 // pred_region
        %s344 = ssub.s32 %s12, 2
        // Predicated region
        $region41: #{tpu_custom_call.1} parent=39 // pred_check
          %p345 = pneg %p125
        $region42: #{tpu_custom_call.1} parent=39 // pred_check_branch
          %347 = sbr.rel (%p345) target = $region44
        $region43: #{tpu_custom_call.1} parent=39 // pred_region
          %s348 = sand.u32 %s110, 1
          %s349 = scalar_lea.sflag [#allocation3], %s348
          %s350 = sand.u32 %s110, 1
          %s351 = smul.addr %s350, 8
          %s352 = scalar_lea.vmem [#allocation2], %s351
          %354 = dma.done %s349, 128
        $region44: #{tpu_custom_call.1} parent=39 // pred_fallthru
          _
      $region40: #{tpu_custom_call.1} parent=5 // pred_fallthru
        _
    $region6: #{tpu_custom_call.1} parent=1 // loop_footer
      %s16 = sadd.s32 1, %s12
    $region7: #{tpu_custom_call.1} parent=1 // loop_footer_branch
      %11 = sbr.rel target = $region3
    $region8: #{tpu_custom_call.1} parent=1 // loop_exit
      _
    %355 = vsyncpa [#allocation3], 1
    %s356 = scalar_lea.sflag [#allocation3], 1
    %357 = vsyncpa %s356, 1

</llo_original>
